<compile_context>
chip_gen: v6e
topology: v6e:2x2x1
jax: 0.10.0
libtpu: 0.0.40
codegen_flags: <defaults>
</compile_context>

<pallas_src>
import numpy as np
import jax
import jax.numpy as jnp
from jax.experimental import pallas as pl
from jax.experimental.pallas import tpu as pltpu

BN_EPS = 1e-5
LANE = 128


# ----------------------------- Pallas kernels -------------------------------------
def _bn_relu_from_stats(h, ss_ref):
    """Folded BatchNorm (scale/shift precomputed from full-batch stats) + ReLU."""
    return jnp.maximum(h * ss_ref[0:1, :] + ss_ref[1:2, :], 0.0)


def _stats1_kernel(x_ref, w1_ref, acc_ref):
    """Pass 1: accumulate per-feature sum / sum-of-squares of h1_pre = x @ W1."""
    @pl.when(pl.program_id(0) == 0)
    def _init():
        acc_ref[...] = jnp.zeros_like(acc_ref)

    h = jnp.dot(x_ref[...], w1_ref[...], preferred_element_type=jnp.float32)
    acc_ref[...] += jnp.concatenate(
        [jnp.sum(h, axis=0, keepdims=True),
         jnp.sum(h * h, axis=0, keepdims=True)], axis=0)


def _stats2_kernel(x_ref, w1_ref, ss1_ref, w2_ref, acc_ref):
    """Pass 2: given folded BN1, accumulate sum / sum-of-squares of h2_pre = h1 @ W2."""
    @pl.when(pl.program_id(0) == 0)
    def _init():
        acc_ref[...] = jnp.zeros_like(acc_ref)

    h1p = jnp.dot(x_ref[...], w1_ref[...], preferred_element_type=jnp.float32)
    h1 = _bn_relu_from_stats(h1p, ss1_ref)
    h2p = jnp.dot(h1.astype(jnp.bfloat16), w2_ref[...],
                  preferred_element_type=jnp.float32)
    acc_ref[...] += jnp.concatenate(
        [jnp.sum(h2p, axis=0, keepdims=True),
         jnp.sum(h2p * h2p, axis=0, keepdims=True)], axis=0)


def _final_kernel(x_ref, w1_ref, ss1_ref, w2_ref, ss2_ref, w3_ref, b3_ref, o_ref):
    """Pass 3 (batch-parallel): full forward with folded BN stats; lane-dense output."""
    h1p = jnp.dot(x_ref[...], w1_ref[...], preferred_element_type=jnp.float32)
    h1 = _bn_relu_from_stats(h1p, ss1_ref)
    h2p = jnp.dot(h1.astype(jnp.bfloat16), w2_ref[...],
                  preferred_element_type=jnp.float32)
    h2 = _bn_relu_from_stats(h2p, ss2_ref)
    out = jnp.dot(h2.astype(jnp.bfloat16), w3_ref[...],
                  preferred_element_type=jnp.float32) + b3_ref[...]
    o_ref[...] = out.astype(o_ref.dtype)


def _fused_kernel(x_ref, w1_ref, gb1_ref, w2_ref, gb2_ref, w3_ref, b3_ref, o_ref):
    """Single-block path (whole batch VMEM-resident): BN stats computed in-kernel."""
    def bn_relu(h, gb_ref):
        mu = jnp.mean(h, axis=0, keepdims=True)
        var = jnp.mean(h * h, axis=0, keepdims=True) - mu * mu   # biased variance
        scale = gb_ref[0:1, :] * jax.lax.rsqrt(var + BN_EPS)
        return jnp.maximum((h - mu) * scale + gb_ref[1:2, :], 0.0)

    h1 = bn_relu(jnp.dot(x_ref[...], w1_ref[...],
                         preferred_element_type=jnp.float32), gb1_ref)
    h2 = bn_relu(jnp.dot(h1.astype(jnp.bfloat16), w2_ref[...],
                         preferred_element_type=jnp.float32), gb2_ref)
    out = jnp.dot(h2.astype(jnp.bfloat16), w3_ref[...],
                  preferred_element_type=jnp.float32) + b3_ref[...]
    o_ref[...] = out.astype(o_ref.dtype)


# ----------------------------- Wrapper ---------------------------------------------
def _full_spec(a):
    # All parameter operands are 2-D and stay resident (constant block index).
    return pl.BlockSpec(a.shape, lambda i: (0, 0))


def _fold_bn(sums, count, gb):
    """Fold full-batch sums + BN affine params into a single (scale, shift) pair."""
    mean = sums[0:1, :] / count
    var = sums[1:2, :] / count - mean * mean          # biased variance (PyTorch BN fwd)
    scale = gb[0:1, :] * jax.lax.rsqrt(var + BN_EPS)
    shift = gb[1:2, :] - mean * scale
    return jnp.concatenate([scale, shift], axis=0)    # (2, d)


def _pick_batch_tile(batch, tb):
    tb = min(tb, batch)
    for cand in range(tb, 7, -1):
        if batch % cand == 0 and cand % 8 == 0:
            return cand
    return batch


def sparse_nn_forward(x, params, out_dim, *, tb=512):
    """Forward pass of the sparse (KAN-style) MLP.

    If the whole batch fits in one tile, a single fused kernel is used.  Otherwise
    the batch is tiled: two stats-accumulation passes (one per BatchNorm layer) plus
    one batch-parallel output pass, so BN statistics remain full-batch exact.
    """
    B, d0 = x.shape
    w1, w2, w3p = params["w1"], params["w2"], params["w3p"]
    gb1, gb2, b3p = params["gb1"], params["gb2"], params["b3p"]
    d1, d2, npad = w1.shape[1], w2.shape[1], w3p.shape[1]

    xb = x.astype(jnp.bfloat16)
    tb = _pick_batch_tile(B, tb)
    n_tiles = B // tb

    x_spec = pl.BlockSpec((tb, d0), lambda i: (i, 0))
    out_spec = pl.BlockSpec((tb, npad), lambda i: (i, 0))   # lane-dense (128-wide) store

    if n_tiles == 1:
        out_p = pl.pallas_call(
            _fused_kernel,
            out_shape=jax.ShapeDtypeStruct((B, npad), jnp.float32),
            grid=(1,),
            in_specs=[x_spec, _full_spec(w1), _full_spec(gb1), _full_spec(w2),
                      _full_spec(gb2), _full_spec(w3p), _full_spec(b3p)],
            out_specs=out_spec,
            compiler_params=pltpu.CompilerParams(dimension_semantics=("arbitrary",)),
        )(xb, w1, gb1, w2, gb2, w3p, b3p)
        return out_p[:, :out_dim]

    acc_params = pltpu.CompilerParams(dimension_semantics=("arbitrary",))

    # Pass 1: full-batch stats of h1_pre = x @ W1 (accumulated across batch tiles).
    sums1 = pl.pallas_call(
        _stats1_kernel,
        out_shape=jax.ShapeDtypeStruct((2, d1), jnp.float32),
        grid=(n_tiles,),
        in_specs=[x_spec, _full_spec(w1)],
        out_specs=pl.BlockSpec((2, d1), lambda i: (0, 0)),
        compiler_params=acc_params,
    )(xb, w1)
    ss1 = _fold_bn(sums1, B, gb1)

    # Pass 2: full-batch stats of h2_pre = relu(bn1(x @ W1)) @ W2.
    sums2 = pl.pallas_call(
        _stats2_kernel,
        out_shape=jax.ShapeDtypeStruct((2, d2), jnp.float32),
        grid=(n_tiles,),
        in_specs=[x_spec, _full_spec(w1), _full_spec(ss1), _full_spec(w2)],
        out_specs=pl.BlockSpec((2, d2), lambda i: (0, 0)),
        compiler_params=acc_params,
    )(xb, w1, ss1, w2)
    ss2 = _fold_bn(sums2, B, gb2)

    # Pass 3: batch-parallel output tiles (v7x: both TensorCores take tiles).
    out_p = pl.pallas_call(
        _final_kernel,
        out_shape=jax.ShapeDtypeStruct((B, npad), jnp.float32),
        grid=(n_tiles,),
        in_specs=[x_spec, _full_spec(w1), _full_spec(ss1), _full_spec(w2),
                  _full_spec(ss2), _full_spec(w3p), _full_spec(b3p)],
        out_specs=out_spec,
        compiler_params=pltpu.CompilerParams(dimension_semantics=("parallel",)),
    )(xb, w1, ss1, w2, ss2, w3p, b3p)
    return out_p[:, :out_dim]


# ----------------------------- Parameter setup (plain JAX glue) --------------------
def sparsity_mask(out_dim, in_dim, input_neurons, output_neurons):
    # Mirrors SparseNeuralNetwork.hidden_sparistiy_masks.
    mask = np.zeros((out_dim, in_dim), dtype=np.float32)
    for i in range(in_dim):
        mask[i * output_neurons:(i + 1) * output_neurons,
             i * input_neurons:(i + 1) * input_neurons] = 1.0
    return jnp.asarray(mask)


def _linear_init(key, out_features, in_features):
    kw, kb = jax.random.split(key)
    bound = 1.0 / np.sqrt(in_features)
    w = jax.random.uniform(kw, (out_features, in_features), jnp.float32, -bound, bound)
    b = jax.random.uniform(kb, (1, out_features), jnp.float32, -bound, bound)
    return w, b


def init_params(key, in_dim, out_dim, h=(8, 4)):
    hs = [1] + list(h)
    d0, d1, d2 = hs[0] * in_dim, hs[1] * in_dim, hs[2] * in_dim
    npad = max(LANE, ((out_dim + LANE - 1) // LANE) * LANE)

    k1, k2, k3, k4, k5, k6, k7 = jax.random.split(key, 7)

    # Layer 1 (Linear d0 -> d1), block-diagonally masked.  Bias dropped: it is
    # cancelled exactly by the following training-mode BatchNorm.
    w1, _ = _linear_init(k1, d1, d0)                       # torch layout (out, in)
    w1 = w1 * sparsity_mask(d1, d0, hs[0], hs[1])          # multiply_weight_masks
    # Layer 2 (Linear d1 -> d2), masked; bias dropped for the same reason.
    w2, _ = _linear_init(k2, d2, d1)
    w2 = w2 * sparsity_mask(d2, d1, hs[1], hs[2])
    # fc2 (Linear d2 -> out_dim), unmasked; weights/bias lane-padded to npad features.
    w3, b3 = _linear_init(k3, out_dim, d2)
    w3p = jnp.zeros((d2, npad), jnp.float32).at[:, :out_dim].set(w3.T)
    b3p = jnp.zeros((1, npad), jnp.float32).at[:, :out_dim].set(b3)

    # BatchNorm affine params (near PyTorch defaults of 1 / 0), packed per layer.
    g1 = 1.0 + 0.1 * jax.random.normal(k4, (1, d1), jnp.float32)
    be1 = 0.1 * jax.random.normal(k5, (1, d1), jnp.float32)
    g2 = 1.0 + 0.1 * jax.random.normal(k6, (1, d2), jnp.float32)
    be2 = 0.1 * jax.random.normal(k7, (1, d2), jnp.float32)

    return {
        "w1": w1.T.astype(jnp.bfloat16),    # kernel weights are (in, out); bf16 for MXU
        "w2": w2.T.astype(jnp.bfloat16),
        "w3p": w3p.astype(jnp.bfloat16),
        "b3p": b3p,
        "gb1": jnp.concatenate([g1, be1], axis=0),   # (2, d1): row 0 gamma, row 1 beta
        "gb2": jnp.concatenate([g2, be2], axis=0),   # (2, d2)
    }


# ----------------------------- Pure-JAX reference (for verification) ---------------
def reference_forward(x, params, out_dim):
    """Same numerics as the kernels (bf16 MXU inputs, f32 accumulation/BN math).
    Relative to a full-f32 PyTorch forward the only difference is bf16 rounding of
    the matmul inputs (the dropped pre-BN biases are mathematically irrelevant)."""
    B = x.shape[0]
    xb = x.astype(jnp.bfloat16)

    def bn_relu(hp, gb):
        sums = jnp.concatenate([jnp.sum(hp, axis=0, keepdims=True),
                                jnp.sum(hp * hp, axis=0, keepdims=True)], axis=0)
        ss = _fold_bn(sums, B, gb)
        return jnp.maximum(hp * ss[0:1, :] + ss[1:2, :], 0.0)

    h1 = bn_relu(jnp.dot(xb, params["w1"], preferred_element_type=jnp.float32),
                 params["gb1"])
    h2 = bn_relu(jnp.dot(h1.astype(jnp.bfloat16), params["w2"],
                         preferred_element_type=jnp.float32), params["gb2"])
    out = jnp.dot(h2.astype(jnp.bfloat16), params["w3p"],
                  preferred_element_type=jnp.float32) + params["b3p"]
    return out[:, :out_dim]


# ----------------------------- Main -------------------------------------------------
if __name__ == "__main__":
    in_dim, out_dim, batch = 16, 4, 256        # x: (batch, in_dim)
    key = jax.random.PRNGKey(0)
    kx, kp = jax.random.split(key)

    x = jax.random.normal(kx, (batch, in_dim), jnp.float32)
    params = init_params(kp, in_dim, out_dim, h=(8, 4))

    # Batch-tiled multi-pass path (4 tiles of 64 rows; VMEM-portable / scalable).
    out_tiled = jax.block_until_ready(sparse_nn_forward(x, params, out_dim, tb=64))
    # Single fused-kernel path (whole batch resident in one VMEM block).
    out_fused = jax.block_until_ready(sparse_nn_forward(x, params, out_dim, tb=batch))

    ref = reference_forward(x, params, out_dim)
    np.testing.assert_allclose(np.asarray(out_tiled), np.asarray(ref),
                               rtol=1e-3, atol=1e-3)
    np.testing.assert_allclose(np.asarray(out_fused), np.asarray(ref),
                               rtol=1e-3, atol=1e-3)

    print("KERNEL_OK")
</pallas_src>

<mosaic_0001>
module attributes {stable_mosaic.version = 11 : i64} {
  func.func @_stats1_kernel(%arg0: i32, %arg1: memref<64x16xbf16, #tpu.memory_space<vmem>>, %arg2: memref<16x128xbf16, #tpu.memory_space<vmem>>, %arg3: memref<2x128xf32, #tpu.memory_space<vmem>>) attributes {dimension_semantics = [#tpu.dimension_semantics<arbitrary>], iteration_bounds = array<i64: 4>, scalar_prefetch = 0 : i64, scratch_operands = 0 : i64, tpu.core_type = #tpu.core_type<tc>, window_params = [{transform_indices = @transform_0, window_bounds = array<i64: 64, 16>}, {pipeline_mode = #tpu.pipeline_mode<synchronous>, transform_indices = @transform_1, window_bounds = array<i64: 16, 128>}, {pipeline_mode = #tpu.pipeline_mode<synchronous>, transform_indices = @transform_2, window_bounds = array<i64: 2, 128>}]} {
    %c0_i32 = arith.constant 0 : i32
    %0 = arith.cmpi eq, %arg0, %c0_i32 : i32
    %1 = arith.extui %0 : i1 to i32
    %c0_i32_0 = arith.constant 0 : i32
    %2 = arith.cmpi ne, %1, %c0_i32_0 : i32
    scf.if %2 {
      %cst_10 = arith.constant 0.000000e+00 : f32
      %15 = vector.broadcast %cst_10 : f32 to vector<2x128xf32>
      %c0_11 = arith.constant 0 : index
      %c0_12 = arith.constant 0 : index
      %16 = vector.load %arg3[%c0_11, %c0_12] : memref<2x128xf32, #tpu.memory_space<vmem>>, vector<2x128xf32>
      tpu.vector_store %arg3[%c0_11, %c0_12], %15 {strides = array<i32>} : memref<2x128xf32, #tpu.memory_space<vmem>>, vector<2x128xf32>,
    } else {
    }
    %c0 = arith.constant 0 : index
    %c0_1 = arith.constant 0 : index
    %3 = vector.load %arg1[%c0, %c0_1] : memref<64x16xbf16, #tpu.memory_space<vmem>>, vector<64x16xbf16>
    %c0_2 = arith.constant 0 : index
    %c0_3 = arith.constant 0 : index
    %4 = vector.load %arg2[%c0_2, %c0_3] : memref<16x128xbf16, #tpu.memory_space<vmem>>, vector<16x128xbf16>
    %cst = arith.constant dense<0.000000e+00> : vector<64x128xf32>
    %5 = tpu.matmul %3, %4, %cst {dimension_numbers = #tpu.dot_dimension_numbers<[1], [0], [0], [1], [0, 0, 1, 1], [], []>} : vector<64x16xbf16>, vector<16x128xbf16>, vector<64x128xf32> -> vector<64x128xf32>
    %c0_4 = arith.constant 0 : index
    %c0_5 = arith.constant 0 : index
    %6 = vector.load %arg3[%c0_4, %c0_5] : memref<2x128xf32, #tpu.memory_space<vmem>>, vector<2x128xf32>
    %cst_6 = arith.constant dense<0.000000e+00> : vector<128xf32>
    %7 = vector.multi_reduction <add>, %5, %cst_6 [0] : vector<64x128xf32> to vector<128xf32>
    %8 = vector.shape_cast %7 : vector<128xf32> to vector<1x128xf32>
    %9 = arith.mulf %5, %5 : vector<64x128xf32>
    %cst_7 = arith.constant dense<0.000000e+00> : vector<128xf32>
    %10 = vector.multi_reduction <add>, %9, %cst_7 [0] : vector<64x128xf32> to vector<128xf32>
    %11 = vector.shape_cast %10 : vector<128xf32> to vector<1x128xf32>
    %12 = tpu.concatenate %8, %11 in 0 : vector<1x128xf32>, vector<1x128xf32> -> vector<2x128xf32>
    %13 = arith.addf %6, %12 : vector<2x128xf32>
    %c0_8 = arith.constant 0 : index
    %c0_9 = arith.constant 0 : index
    %14 = vector.load %arg3[%c0_8, %c0_9] : memref<2x128xf32, #tpu.memory_space<vmem>>, vector<2x128xf32>
    tpu.vector_store %arg3[%c0_8, %c0_9], %13 {strides = array<i32>} : memref<2x128xf32, #tpu.memory_space<vmem>>, vector<2x128xf32>,
    return
  }
  func.func @transform_0(%arg0: i32) -> (i32, i32) {
    %c0_i32 = arith.constant 0 : i32
    %c0_i32_0 = arith.constant 0 : i32
    return %arg0, %c0_i32 : i32, i32
  }
  func.func @transform_1(%arg0: i32) -> (i32, i32) {
    %c0_i32 = arith.constant 0 : i32
    %c0_i32_0 = arith.constant 0 : i32
    %c0_i32_1 = arith.constant 0 : i32
    return %c0_i32, %c0_i32_0 : i32, i32
  }
  func.func @transform_2(%arg0: i32) -> (i32, i32) {
    %c0_i32 = arith.constant 0 : i32
    %c0_i32_0 = arith.constant 0 : i32
    %c0_i32_1 = arith.constant 0 : i32
    return %c0_i32, %c0_i32_0 : i32, i32
  }
}

</mosaic_0001>

<llo_original>
// kernel: tpu_custom_call.1
$region0: #{tpu_custom_call.1}
  #allocation0 [shape = 'u32[]', space=smem, size = 0x4, offset = 0x4, fixed_abs, tag = 'smem constant byte address 0x4 - core index']
  #allocation1 [shape = 'u32[144,128]{1,0:T(1,128)}', space=vmem, size = 0x12000, scoped, tag = 'internal scratch']
  %s0 = inlined_call_operand.vmem [shape: bf16[256,16], index: 0, kind: input, shape index: {}]
  %s1 = inlined_call_operand.vmem [shape: bf16[16,128], index: 1, kind: input, shape index: {}]
  %s2 = inlined_call_operand.hbm [shape: f32[2,128], index: 2, kind: output, shape index: {}]
  %s3 = sld [smem:[#allocation0]]
  $region45: #{tpu_custom_call.1} parent=0
    _
  %s5 = ssub.s32 1, %s3
  %s6 = scalar_select 0, %s5, %s3
  $region1: #{tpu_custom_call.1} parent=0
    #allocation2 [shape = 'u8[1024]{0}', space=vmem, size = 0x400, scoped, tag = 'output window, operand 0, single buffered']
    #allocation3 [shape = 's32[2]{0}', space=sflag, size = 0x8, scoped, tag = 'scoped memory for tpu_custom_call.1']
    %7 = vsyncpa [#allocation3], 0
    loop: start=0, step=1, limit=6
    $region2: #{tpu_custom_call.1} parent=1 // loop_pre_header
      _
    $region3: #{tpu_custom_call.1} parent=1 // loop_header
      %s9 = sphi 0, %s13
      %p10 = scmp.ge.s32.totalorder %s9, 6
      %s19 = sphi 0, %s21
      %s22 = sphi 0, %s19
      %s23 = sphi 0, %s22
      %s39 = sphi 0, %s23
      %s43 = sphi 0, %s43
      %s45 = sphi 0, %s43
      %s46 = sphi 0, %s45
      %s60 = sphi 0, %s46
      %s64 = sphi 0, %s64
      %s66 = sphi 0, %s64
      %s67 = sphi 0, %s66
      %s81 = sphi 0, %s67
    $region4: #{tpu_custom_call.1} parent=1 // loop_header_branch
      %12 = sbr.rel (%p10) target = $region8
    $region5: #{tpu_custom_call.1} parent=1 // loop_body
      %s14 = ssub.s32 %s9, 1
      %s15 = ssub.s32 %s9, 2
      %s16 = sadd.s32 %s9, 1
      %s17 = ssub.s32 %s9, %s16
      %p18 = scmp.eq.s32.totalorder %s17, 0
      %s20 = sadd.s32 %s19, 1
      %s21 = scalar_select %p18, %s19, %s20
      %p24 = pneg %p18
      %p25 = scmp.eq.s32.totalorder %s9, 3
      %p26 = por %p24, %p25
      %p27 = scmp.ne.s32.totalorder %s19, %s22
      %p28 = scmp.eq.s32.totalorder %s9, 0
      %p29 = por %p27, %p28
      %p30 = scmp.ne.s32.totalorder %s19, %s22
      %p31 = scmp.eq.s32.totalorder %s14, 3
      %p32 = por %p30, %p31
      %p33 = scmp.ne.s32.totalorder %s22, %s23
      %p34 = scmp.eq.s32.totalorder %s14, 0
      %p35 = por %p33, %p34
      %p36 = scmp.ne.s32.totalorder %s22, %s23
      %p37 = scmp.eq.s32.totalorder %s15, 3
      %p38 = por %p36, %p37
      %p40 = scmp.ne.s32.totalorder %s23, %s39
      %p41 = scmp.eq.s32.totalorder %s15, 0
      %p42 = por %p40, %p41
      %s44 = sadd.s32 %s43, 1
      %p47 = scmp.eq.s32.totalorder %s9, 3
      %p48 = scmp.ne.s32.totalorder %s43, %s45
      %p49 = scmp.eq.s32.totalorder %s9, 0
      %p50 = por %p48, %p49
      %p51 = scmp.ne.s32.totalorder %s43, %s45
      %p52 = scmp.eq.s32.totalorder %s14, 3
      %p53 = por %p51, %p52
      %p54 = scmp.ne.s32.totalorder %s45, %s46
      %p55 = scmp.eq.s32.totalorder %s14, 0
      %p56 = por %p54, %p55
      %p57 = scmp.ne.s32.totalorder %s45, %s46
      %p58 = scmp.eq.s32.totalorder %s15, 3
      %p59 = por %p57, %p58
      %p61 = scmp.ne.s32.totalorder %s46, %s60
      %p62 = scmp.eq.s32.totalorder %s15, 0
      %p63 = por %p61, %p62
      %s65 = sadd.s32 %s64, 1
      %p68 = scmp.eq.s32.totalorder %s9, 3
      %p69 = scmp.ne.s32.totalorder %s64, %s66
      %p70 = scmp.eq.s32.totalorder %s9, 0
      %p71 = por %p69, %p70
      %p72 = scmp.ne.s32.totalorder %s64, %s66
      %p73 = scmp.eq.s32.totalorder %s14, 3
      %p74 = por %p72, %p73
      %p75 = scmp.ne.s32.totalorder %s66, %s67
      %p76 = scmp.eq.s32.totalorder %s14, 0
      %p77 = por %p75, %p76
      %p78 = scmp.ne.s32.totalorder %s66, %s67
      %p79 = scmp.eq.s32.totalorder %s15, 3
      %p80 = por %p78, %p79
      %p82 = scmp.ne.s32.totalorder %s67, %s81
      %p83 = scmp.eq.s32.totalorder %s15, 0
      %p84 = por %p82, %p83
      %p85 = scmp.le.s32.totalorder 1, %s9
      %p86 = scmp.lt.s32.totalorder %s9, 5
      %p87 = pnand %p85, %p86
      %p88 = pneg %p87
      // Predicated region
      $region9: #{tpu_custom_call.1} parent=5 // pred_check
        _
      $region10: #{tpu_custom_call.1} parent=5 // pred_check_branch
        %90 = sbr.rel (%p87) target = $region12
      $region11: #{tpu_custom_call.1} parent=5 // pred_region
        %s91 = ssub.s32 %s9, 1
        // Predicated region
        $region13: #{tpu_custom_call.1} parent=11 // pred_check
          %p92 = pneg %p56
        $region14: #{tpu_custom_call.1} parent=11 // pred_check_branch
          %94 = sbr.rel (%p92) target = $region16
        $region15: #{tpu_custom_call.1} parent=11 // pred_region
          _
        $region16: #{tpu_custom_call.1} parent=11 // pred_fallthru
          _
      $region12: #{tpu_custom_call.1} parent=5 // pred_fallthru
        _
      %p95 = scmp.lt.s32.totalorder %s9, 4
      // Predicated region
      $region17: #{tpu_custom_call.1} parent=5 // pred_check
        %p96 = pneg %p95
      $region18: #{tpu_custom_call.1} parent=5 // pred_check_branch
        %98 = sbr.rel (%p96) target = $region20
      $region19: #{tpu_custom_call.1} parent=5 // pred_region
        // Predicated region
        $region21: #{tpu_custom_call.1} parent=19 // pred_check
          %p99 = pneg %p29
        $region22: #{tpu_custom_call.1} parent=19 // pred_check_branch
          %101 = sbr.rel (%p99) target = $region24
        $region23: #{tpu_custom_call.1} parent=19 // pred_region
          %s102 = smul.u32 8, %s9
          %p103 = scmp.lt.s32.totalorder %s102, 31
          %s104 = scalar_select %p103, %s102, 31
          %s105 = smul.addr %s104, 4
          %s106 = scalar_lea.vmem %s0, %s105
          %s107 = smul.u32 8, %s9
        $region24: #{tpu_custom_call.1} parent=19 // pred_fallthru
          _
      $region20: #{tpu_custom_call.1} parent=5 // pred_fallthru
        _
      %p108 = scmp.le.s32.totalorder 1, %s9
      %p109 = scmp.lt.s32.totalorder %s9, 5
      %p110 = pnand %p108, %p109
      %p111 = pneg %p110
      // Predicated region
      $region25: #{tpu_custom_call.1} parent=5 // pred_check
        _
      $region26: #{tpu_custom_call.1} parent=5 // pred_check_branch
        %113 = sbr.rel (%p110) target = $region28
      $region27: #{tpu_custom_call.1} parent=5 // pred_region
        %s114 = ssub.s32 %s9, 1
        %s115 = smul.u32 8, %s14
        %p116 = scmp.lt.s32.totalorder %s115, 31
        %s117 = scalar_select %p116, %s115, 31
        %s118 = smul.addr %s117, 4
        %s119 = scalar_lea.vmem %s0, %s118
        %p120 = pneg %p35
        %p121 = pneg %p32
        %p122 = pneg %p56
        %p123 = pneg %p53
        %p124 = pneg %p77
        %p125 = pneg %p74
        %s126 = smul.u32 8, %s14
        %p127 = scmp.lt.s32.totalorder %s126, 31
        %s128 = scalar_select %p127, %s126, 31
        %s129 = smul.addr %s128, 4
        %s130 = scalar_lea.vmem %s0, %s129
        %s131 = smul.u32 8, %s14
        %p133 = scmp.eq.s32.totalorder %s14, 0
        // Predicated region
        $region29: #{tpu_custom_call.1} parent=27 // pred_check
          %p134 = pneg %p133
        $region30: #{tpu_custom_call.1} parent=27 // pred_check_branch
          %136 = sbr.rel (%p134) target = $region32
        $region31: #{tpu_custom_call.1} parent=27 // pred_region
          %137 = vst [vmem:[#allocation2] sm:$0x3] 0.0
        $region32: #{tpu_custom_call.1} parent=27 // pred_fallthru
          _
        %v138 = vld [vmem:[%s130] sm:$0xf]
        %v139 = vld [vmem:[%s130 + $0x4] sm:$0xf]
        %v140 = vld [vmem:[%s130 + $0x8] sm:$0xf]
        %v141 = vld [vmem:[%s130 + $0xc] sm:$0xf]
        %v142 = vld [vmem:[%s130 + $0x10] sm:$0xf]
        %v143 = vld [vmem:[%s130 + $0x14] sm:$0xf]
        %v144 = vld [vmem:[%s130 + $0x18] sm:$0xf]
        %v145 = vld [vmem:[%s130 + $0x1c] sm:$0xf]
        %v146 = vld [vmem:[%s1] sm:$0xf]
        %v147 = vld [vmem:[%s1 + $0x4] sm:$0xf]
        %v156 = vunpack.c.l.b16 %v138
        %v157 = vunpack.c.l.b16 %v139
        %v158 = vunpack.c.l.b16 %v140
        %v159 = vunpack.c.l.b16 %v141
        %v160 = vunpack.c.l.b16 %v142
        %v161 = vunpack.c.l.b16 %v143
        %v162 = vunpack.c.l.b16 %v144
        %v163 = vunpack.c.l.b16 %v145
        %v164 = vpack.c.b16 %v157, %v156
        %v165 = vpack.c.b16 %v159, %v158
        %v166 = vpack.c.b16 %v161, %v160
        %v167 = vpack.c.b16 %v163, %v162
        %v170 = vunpack.c.l.b16 %v146
        %v171 = vunpack.c.l.b16 %v147
        %v172 = vpack.c.b16 %v171, %v170
        %vm174 = vcmask 130048
        %v176 = vsel %vm174, %v164, 0
        %v179 = vsel %vm174, %v165, 0
        %v182 = vsel %vm174, %v166, 0
        %v185 = vsel %vm174, %v167, 0
        %187 = vmatprep.subr.bf16.mxu0 0
        %188 = vmatpush1.bf16.msra.mxu0 0
        %189 = vmatprep.subr.bf16.mxu0 0
        %190 = vmatpush1.bf16.msra.mxu0 0
        %191 = vmatprep.subr.bf16.mxu0 0
        %192 = vmatpush1.bf16.msra.mxu0 0
        %193 = vmatprep.subr.bf16.mxu0 0
        %194 = vmatpush1.bf16.msra.mxu0 0
        %195 = vmatprep.subr.bf16.mxu0 0
        %196 = vmatpush1.bf16.msra.mxu0 0
        %197 = vmatprep.subr.bf16.mxu0 0
        %198 = vmatpush1.bf16.msra.mxu0 0
        %199 = vmatprep.subr.bf16.mxu0 0
        %200 = vmatpush1.bf16.msra.mxu0 0
        %201 = vmatprep.subr.bf16.mxu0 0
        %202 = vmatpush1.bf16.msra.mxu0 %v172
        %203 = vmatprep.subr.bf16.mxu0 0
        %204 = vmatpush2.bf16.msra.mxu0 0
        %205 = vmatprep.subr.bf16.mxu0 0
        %206 = vmatpush2.bf16.msra.mxu0 0
        %207 = vmatprep.subr.bf16.mxu0 0
        %208 = vmatpush2.bf16.msra.mxu0 0
        %209 = vmatprep.subr.bf16.mxu0 0
        %210 = vmatpush2.bf16.msra.mxu0 0
        %211 = vmatprep.subr.bf16.mxu0 0
        %212 = vmatpush2.bf16.msra.mxu0 0
        %213 = vmatprep.subr.bf16.mxu0 0
        %214 = vmatpush2.bf16.msra.mxu0 0
        %215 = vmatprep.subr.bf16.mxu0 0
        %216 = vmatpush2.bf16.msra.mxu0 0
        %217 = vmatprep.subr.bf16.mxu0 0
        %218 = vmatpush2.bf16.msra.mxu0 0
        %219 = vmatprep.mubr.bf16.mxu0 0
        %220 = vmatmul.mubr.bf16.gmra.mxu0 %v176
        %v221 = vpop.f32.mrf.mxu0
        %v222 = vadd.f32 0.0, %v221
        %v223 = vpop.f32.mrf.mxu0
        %v224 = vpop.f32.mrf.mxu0
        %v225 = vadd.f32 0.0, %v224
        %v226 = vpop.f32.mrf.mxu0
        %227 = vmatprep.mubr.bf16.mxu0 0
        %228 = vmatmul.mubr.bf16.gmra.mxu0 %v179
        %v229 = vpop.f32.mrf.mxu0
        %v230 = vadd.f32 0.0, %v229
        %v231 = vpop.f32.mrf.mxu0
        %v232 = vpop.f32.mrf.mxu0
        %v233 = vadd.f32 0.0, %v232
        %v234 = vpop.f32.mrf.mxu0
        %235 = vmatprep.mubr.bf16.mxu0 0
        %236 = vmatmul.mubr.bf16.gmra.mxu0 %v182
        %v237 = vpop.f32.mrf.mxu0
        %v238 = vadd.f32 0.0, %v237
        %v239 = vpop.f32.mrf.mxu0
        %v240 = vpop.f32.mrf.mxu0
        %v241 = vadd.f32 0.0, %v240
        %v242 = vpop.f32.mrf.mxu0
        %243 = vmatprep.mubr.bf16.mxu0 0
        %244 = vmatmul.mubr.bf16.gmra.mxu0 %v185
        %v245 = vpop.f32.mrf.mxu0
        %v246 = vadd.f32 0.0, %v245
        %v247 = vpop.f32.mrf.mxu0
        %v248 = vpop.f32.mrf.mxu0
        %v249 = vadd.f32 0.0, %v248
        %v250 = vpop.f32.mrf.mxu0
        %251 = vdwg.mxu0
        %v252 = vld [vmem:[#allocation2] sm:$0x3]
        %v253 = vadd.f32 %v222, %v225
        %v254 = vadd.f32 %v253, %v230
        %v255 = vadd.f32 %v254, %v233
        %v256 = vadd.f32 %v255, %v238
        %v257 = vadd.f32 %v256, %v241
        %v258 = vadd.f32 %v257, %v246
        %v259 = vadd.f32 %v258, %v249
        %v260 = vrot.slane %v259, 4
        %v261 = vadd.f32 %v259, %v260
        %v262 = vrot.slane %v261, 2
        %v263 = vadd.f32 %v261, %v262
        %v264 = vrot.slane %v263, 1
        %v265 = vadd.f32 %v263, %v264
        %v266 = vmul.f32 %v222, %v222
        %v267 = vmul.f32 %v225, %v225
        %v268 = vmul.f32 %v230, %v230
        %v269 = vmul.f32 %v233, %v233
        %v270 = vmul.f32 %v238, %v238
        %v271 = vmul.f32 %v241, %v241
        %v272 = vmul.f32 %v246, %v246
        %v273 = vmul.f32 %v249, %v249
        %v274 = vadd.f32 %v266, %v267
        %v275 = vadd.f32 %v274, %v268
        %v276 = vadd.f32 %v275, %v269
        %v277 = vadd.f32 %v276, %v270
        %v278 = vadd.f32 %v277, %v271
        %v279 = vadd.f32 %v278, %v272
        %v280 = vadd.f32 %v279, %v273
        %v281 = vrot.slane %v280, 4
        %v282 = vadd.f32 %v280, %v281
        %v283 = vrot.slane %v282, 2
        %v284 = vadd.f32 %v282, %v283
        %v285 = vrot.slane %v284, 1
        %v286 = vadd.f32 %v284, %v285
        %vm287 = vcmask 1040384
        %v288 = vsel %vm287, %v265, %v286
        %v289 = vadd.f32 %v252, %v288
        %290 = vst [vmem:[#allocation2] sm:$0x3] %v289
        // Predicated region
        $region33: #{tpu_custom_call.1} parent=27 // pred_check
          %p291 = pneg %p74
        $region34: #{tpu_custom_call.1} parent=27 // pred_check_branch
          %293 = sbr.rel (%p291) target = $region36
        $region35: #{tpu_custom_call.1} parent=27 // pred_region
          %s295 = ssub.s32 32, 32
          %296 = vsyncadd [#allocation3], %s295
          %s298 = sshll.u32 [#allocation2], 4
          %s299 = int_to_ptr.vmem [resolvable:$true] %s298
          %301 = dma.vmem_to_hbm [thread:$0]  %s299, 32, %s2, [#allocation3]
        $region36: #{tpu_custom_call.1} parent=27 // pred_fallthru
          _
        // Predicated region
        $region37: #{tpu_custom_call.1} parent=27 // pred_check
          %p302 = pneg %p74
        $region38: #{tpu_custom_call.1} parent=27 // pred_check_branch
          %304 = sbr.rel (%p302) target = $region40
        $region39: #{tpu_custom_call.1} parent=27 // pred_region
          %305 = dma.done [#allocation3], 32
        $region40: #{tpu_custom_call.1} parent=27 // pred_fallthru
          _
      $region28: #{tpu_custom_call.1} parent=5 // pred_fallthru
        _
      %p306 = scmp.le.s32.totalorder 2, %s9
      // Predicated region
      $region41: #{tpu_custom_call.1} parent=5 // pred_check
        %p307 = pneg %p306
      $region42: #{tpu_custom_call.1} parent=5 // pred_check_branch
        %309 = sbr.rel (%p307) target = $region44
      $region43: #{tpu_custom_call.1} parent=5 // pred_region
        %s310 = ssub.s32 %s9, 2
      $region44: #{tpu_custom_call.1} parent=5 // pred_fallthru
        _
    $region6: #{tpu_custom_call.1} parent=1 // loop_footer
      %s13 = sadd.s32 1, %s9
    $region7: #{tpu_custom_call.1} parent=1 // loop_footer_branch
      %8 = sbr.rel target = $region3
    $region8: #{tpu_custom_call.1} parent=1 // loop_exit
      _
    %311 = vsyncpa [#allocation3], 1
    %s312 = scalar_lea.sflag [#allocation3], 1
    %313 = vsyncpa %s312, 1

</llo_original>
